<compile_context>
chip_gen: v6e
topology: v6e:2x2x1
jax: 0.10.0
libtpu: 0.0.40
codegen_flags: <defaults>
</compile_context>

<pallas_src>
import functools

import jax
import jax.numpy as jnp
from jax.experimental import pallas as pl
from jax.experimental.pallas import tpu as pltpu

LANE = 128  # TPU lane width; hidden/output feature dims are padded to this.


def _round_up(x, m):
    return ((x + m - 1) // m) * m


# ---------------------------------------------------------------------------
# Kernel: one batch-block of the whole MLP.
#   x_ref  : [batch_block, state_size]        f32 activations (unpadded K)
#   w1_ref : [state_size, feat]               bf16 layer-1 weight
#   wr_ref : [feat, (n_layers-1) * feat]      bf16 packed layers 2..n
#   b_ref  : [1, n_layers * feat]             f32 packed biases
#   o_ref  : [batch_block, feat]              f32 padded output (lane-dense)
# ---------------------------------------------------------------------------
def mlp_kernel(x_ref, w1_ref, wr_ref, b_ref, o_ref, *, n_layers, feat):
    # Layer 1: bf16 inputs into the MXU, f32 accumulate / bias / ReLU.
    h = jnp.dot(x_ref[...].astype(jnp.bfloat16), w1_ref[...],
                preferred_element_type=jnp.float32)
    h = jnp.maximum(h + b_ref[:, 0:feat], 0.0)

    # Layers 2..n from the packed slab (static, lane-aligned slices).
    for j in range(1, n_layers):                       # static (unrolled) loop
        w = wr_ref[:, (j - 1) * feat:j * feat]
        b = b_ref[:, j * feat:(j + 1) * feat]
        h = jnp.dot(h.astype(jnp.bfloat16), w,
                    preferred_element_type=jnp.float32) + b
        if j < n_layers - 1:
            h = jnp.maximum(h, 0.0)                    # ReLU on hidden layers only
    o_ref[...] = h.astype(o_ref.dtype)


# ---------------------------------------------------------------------------
# Parameter packing (done once, outside the hot path).
# params: tuple of (w, b) with w already in [in, out] layout, b in [out].
# ---------------------------------------------------------------------------
def pack_params(params):
    n_layers = len(params)
    state_size = params[0][0].shape[0]
    feat = _round_up(max(w.shape[1] for w, _ in params), LANE)

    # Layer 1: keep the true input dim (K = state_size), pad only output lanes.
    w1 = jnp.zeros((state_size, feat), jnp.bfloat16)
    w1 = w1.at[:, :params[0][0].shape[1]].set(params[0][0].astype(jnp.bfloat16))

    # Layers 2..n packed into one bf16 slab [feat, (n-1)*feat].
    w_rest = jnp.zeros((feat, (n_layers - 1) * feat), jnp.bfloat16)
    for j in range(1, n_layers):
        w, _ = params[j]
        fin, fout = w.shape
        w_rest = w_rest.at[:fin, (j - 1) * feat:(j - 1) * feat + fout].set(
            w.astype(jnp.bfloat16))

    # Biases stay f32, packed into one [1, n*feat] slab.
    b_packed = jnp.zeros((1, n_layers * feat), jnp.float32)
    for j, (_, b) in enumerate(params):
        b_packed = b_packed.at[:, j * feat:j * feat + b.shape[0]].set(
            b.reshape(1, -1).astype(jnp.float32))

    return w1, w_rest, b_packed, feat


# ---------------------------------------------------------------------------
# Forward pass.
# ---------------------------------------------------------------------------
def network_forward(state, packed, action_size, *, batch_block=None):
    w1, w_rest, b_packed, feat = packed
    n_layers = 1 + w_rest.shape[1] // feat
    batch, state_size = state.shape
    assert w1.shape[0] == state_size

    if batch_block is None:
        # Aim for >= 2 batch blocks whenever batch >= 16 so both v7x
        # TensorCores get work; cap at 512 rows (sweepable) to amortize the
        # per-grid-step pipeline overhead while staying far below VMEM limits.
        batch_block = max(8, min(512, _round_up(pl.cdiv(batch, 2), 8)))
    grid = (pl.cdiv(batch, batch_block),)   # last partial block clipped by Pallas

    kernel = functools.partial(mlp_kernel, n_layers=n_layers, feat=feat)

    # Advisory cost estimate (tiny kernel -> let XLA overlap neighbours).
    flops = 2 * batch * feat * (state_size + (n_layers - 1) * feat)
    bytes_accessed = (4 * state.size + 2 * (w1.size + w_rest.size)
                      + 4 * b_packed.size + 4 * batch * feat)

    out_padded = pl.pallas_call(
        kernel,
        out_shape=jax.ShapeDtypeStruct((batch, feat), jnp.float32),
        grid=grid,
        in_specs=[
            # Activations: one block per grid step -> pipelined DMAs.
            # (last dim = full array dim, so no lane padding needed.)
            pl.BlockSpec((batch_block, state_size), lambda i: (i, 0)),
            # Weights / biases: constant block index -> fetched once, VMEM-resident.
            pl.BlockSpec((state_size, feat), lambda i: (0, 0)),
            pl.BlockSpec((feat, (n_layers - 1) * feat), lambda i: (0, 0)),
            pl.BlockSpec((1, n_layers * feat), lambda i: (0, 0)),
        ],
        out_specs=pl.BlockSpec((batch_block, feat), lambda i: (i, 0)),
        compiler_params=pltpu.CompilerParams(
            dimension_semantics=("parallel",)),   # shard batch blocks across TCs
        cost_estimate=pl.CostEstimate(
            flops=flops, transcendentals=0, bytes_accessed=bytes_accessed),
    )(state.astype(jnp.float32), w1, w_rest, b_packed)

    return out_padded[:, :action_size]


# ---------------------------------------------------------------------------
# Init (mimics PyTorch nn.Linear default U(-1/sqrt(fan_in), 1/sqrt(fan_in))),
# weights returned already transposed to [in, out].
# ---------------------------------------------------------------------------
def init_linear(key, fan_in, fan_out):
    kw, kb = jax.random.split(key)
    bound = 1.0 / jnp.sqrt(jnp.asarray(fan_in, jnp.float32))
    w = jax.random.uniform(kw, (fan_in, fan_out), jnp.float32, -bound, bound)
    b = jax.random.uniform(kb, (fan_out,), jnp.float32, -bound, bound)
    return w, b


def init_network_params(key, state_size, action_size,
                        fc1_units=100, fc2_units=100, fc3_units=100):
    k1, k2, k3, k4 = jax.random.split(key, 4)
    return (
        init_linear(k1, state_size, fc1_units),
        init_linear(k2, fc1_units, fc2_units),
        init_linear(k3, fc2_units, fc3_units),
        init_linear(k4, fc3_units, action_size),
    )


def network_forward_ref(state, params):
    """Pure-JAX f32 reference for correctness checking."""
    (w1, b1), (w2, b2), (w3, b3), (w4, b4) = params
    h = jnp.maximum(state @ w1 + b1, 0.0)
    h = jnp.maximum(h @ w2 + b2, 0.0)
    h = jnp.maximum(h @ w3 + b3, 0.0)
    return h @ w4 + b4


if __name__ == "__main__":
    key = jax.random.PRNGKey(0)
    k_params, k_state = jax.random.split(key)

    batch = 8
    state_size = 16
    action_size = 4

    params = init_network_params(k_params, state_size, action_size)
    packed = pack_params(params)   # one-time bf16 packing / padding of all layers
    state = jax.random.normal(k_state, (batch, state_size), jnp.float32)

    out = network_forward(state, packed, action_size)
    out = jax.block_until_ready(out)

    ref = network_forward_ref(state, params)
    assert out.shape == (batch, action_size), out.shape
    # bf16 MXU inputs -> loosened tolerance vs. the f32 reference.
    max_err = jnp.max(jnp.abs(out - ref))
    assert jnp.allclose(out, ref, atol=3e-2, rtol=3e-2), \
        f"max abs err = {max_err}"

    print("KERNEL_OK")
</pallas_src>

<mosaic_0001>
module attributes {stable_mosaic.version = 11 : i64} {
  func.func @mlp_kernel(%arg0: i32, %arg1: memref<8x16xf32, #tpu.memory_space<vmem>>, %arg2: memref<16x128xbf16, #tpu.memory_space<vmem>>, %arg3: memref<128x384xbf16, #tpu.memory_space<vmem>>, %arg4: memref<1x512xf32, #tpu.memory_space<vmem>>, %arg5: memref<8x128xf32, #tpu.memory_space<vmem>>) attributes {dimension_semantics = [#tpu.dimension_semantics<parallel>], iteration_bounds = array<i64: 1>, scalar_prefetch = 0 : i64, scratch_operands = 0 : i64, tpu.core_type = #tpu.core_type<tc>, window_params = [{transform_indices = @transform_0, window_bounds = array<i64: 8, 16>}, {pipeline_mode = #tpu.pipeline_mode<synchronous>, transform_indices = @transform_1, window_bounds = array<i64: 16, 128>}, {pipeline_mode = #tpu.pipeline_mode<synchronous>, transform_indices = @transform_2, window_bounds = array<i64: 128, 384>}, {pipeline_mode = #tpu.pipeline_mode<synchronous>, transform_indices = @transform_3, window_bounds = array<i64: 1, 512>}, {transform_indices = @transform_4, window_bounds = array<i64: 8, 128>}]} {
    %c0 = arith.constant 0 : index
    %c0_0 = arith.constant 0 : index
    %0 = vector.load %arg1[%c0, %c0_0] : memref<8x16xf32, #tpu.memory_space<vmem>>, vector<8x16xf32>
    %1 = arith.truncf %0 : vector<8x16xf32> to vector<8x16xbf16>
    %c0_1 = arith.constant 0 : index
    %c0_2 = arith.constant 0 : index
    %2 = vector.load %arg2[%c0_1, %c0_2] : memref<16x128xbf16, #tpu.memory_space<vmem>>, vector<16x128xbf16>
    %cst = arith.constant dense<0.000000e+00> : vector<8x128xf32>
    %3 = tpu.matmul %1, %2, %cst {dimension_numbers = #tpu.dot_dimension_numbers<[1], [0], [0], [1], [0, 0, 1, 1], [], []>} : vector<8x16xbf16>, vector<16x128xbf16>, vector<8x128xf32> -> vector<8x128xf32>
    %c0_3 = arith.constant 0 : index
    %c0_4 = arith.constant 0 : index
    %4 = vector.load %arg4[%c0_3, %c0_4] : memref<1x512xf32, #tpu.memory_space<vmem>>, vector<1x128xf32>
    %5 = vector.broadcast %4 : vector<1x128xf32> to vector<8x128xf32>
    %6 = arith.addf %3, %5 : vector<8x128xf32>
    %cst_5 = arith.constant 0.000000e+00 : f32
    %7 = vector.broadcast %cst_5 : f32 to vector<8x128xf32>
    %8 = arith.maximumf %6, %7 : vector<8x128xf32>
    %c0_6 = arith.constant 0 : index
    %c0_7 = arith.constant 0 : index
    %9 = vector.load %arg3[%c0_6, %c0_7] : memref<128x384xbf16, #tpu.memory_space<vmem>>, vector<128x128xbf16>
    %c0_8 = arith.constant 0 : index
    %c128 = arith.constant 128 : index
    %10 = vector.load %arg4[%c0_8, %c128] : memref<1x512xf32, #tpu.memory_space<vmem>>, vector<1x128xf32>
    %11 = arith.truncf %8 : vector<8x128xf32> to vector<8x128xbf16>
    %cst_9 = arith.constant dense<0.000000e+00> : vector<8x128xf32>
    %12 = tpu.matmul %11, %9, %cst_9 {dimension_numbers = #tpu.dot_dimension_numbers<[1], [0], [0], [1], [0, 0, 1, 1], [], []>} : vector<8x128xbf16>, vector<128x128xbf16>, vector<8x128xf32> -> vector<8x128xf32>
    %13 = vector.broadcast %10 : vector<1x128xf32> to vector<8x128xf32>
    %14 = arith.addf %12, %13 : vector<8x128xf32>
    %cst_10 = arith.constant 0.000000e+00 : f32
    %15 = vector.broadcast %cst_10 : f32 to vector<8x128xf32>
    %16 = arith.maximumf %14, %15 : vector<8x128xf32>
    %c0_11 = arith.constant 0 : index
    %c128_12 = arith.constant 128 : index
    %17 = vector.load %arg3[%c0_11, %c128_12] : memref<128x384xbf16, #tpu.memory_space<vmem>>, vector<128x128xbf16>
    %c0_13 = arith.constant 0 : index
    %c256 = arith.constant 256 : index
    %18 = vector.load %arg4[%c0_13, %c256] : memref<1x512xf32, #tpu.memory_space<vmem>>, vector<1x128xf32>
    %19 = arith.truncf %16 : vector<8x128xf32> to vector<8x128xbf16>
    %cst_14 = arith.constant dense<0.000000e+00> : vector<8x128xf32>
    %20 = tpu.matmul %19, %17, %cst_14 {dimension_numbers = #tpu.dot_dimension_numbers<[1], [0], [0], [1], [0, 0, 1, 1], [], []>} : vector<8x128xbf16>, vector<128x128xbf16>, vector<8x128xf32> -> vector<8x128xf32>
    %21 = vector.broadcast %18 : vector<1x128xf32> to vector<8x128xf32>
    %22 = arith.addf %20, %21 : vector<8x128xf32>
    %cst_15 = arith.constant 0.000000e+00 : f32
    %23 = vector.broadcast %cst_15 : f32 to vector<8x128xf32>
    %24 = arith.maximumf %22, %23 : vector<8x128xf32>
    %c0_16 = arith.constant 0 : index
    %c256_17 = arith.constant 256 : index
    %25 = vector.load %arg3[%c0_16, %c256_17] : memref<128x384xbf16, #tpu.memory_space<vmem>>, vector<128x128xbf16>
    %c0_18 = arith.constant 0 : index
    %c384 = arith.constant 384 : index
    %26 = vector.load %arg4[%c0_18, %c384] : memref<1x512xf32, #tpu.memory_space<vmem>>, vector<1x128xf32>
    %27 = arith.truncf %24 : vector<8x128xf32> to vector<8x128xbf16>
    %cst_19 = arith.constant dense<0.000000e+00> : vector<8x128xf32>
    %28 = tpu.matmul %27, %25, %cst_19 {dimension_numbers = #tpu.dot_dimension_numbers<[1], [0], [0], [1], [0, 0, 1, 1], [], []>} : vector<8x128xbf16>, vector<128x128xbf16>, vector<8x128xf32> -> vector<8x128xf32>
    %29 = vector.broadcast %26 : vector<1x128xf32> to vector<8x128xf32>
    %30 = arith.addf %28, %29 : vector<8x128xf32>
    %c0_20 = arith.constant 0 : index
    %c0_21 = arith.constant 0 : index
    %31 = vector.load %arg5[%c0_20, %c0_21] : memref<8x128xf32, #tpu.memory_space<vmem>>, vector<8x128xf32>
    tpu.vector_store %arg5[%c0_20, %c0_21], %30 {strides = array<i32>} : memref<8x128xf32, #tpu.memory_space<vmem>>, vector<8x128xf32>,
    return
  }
  func.func @transform_0(%arg0: i32) -> (i32, i32) {
    %c0_i32 = arith.constant 0 : i32
    %c0_i32_0 = arith.constant 0 : i32
    return %arg0, %c0_i32 : i32, i32
  }
  func.func @transform_1(%arg0: i32) -> (i32, i32) {
    %c0_i32 = arith.constant 0 : i32
    %c0_i32_0 = arith.constant 0 : i32
    %c0_i32_1 = arith.constant 0 : i32
    return %c0_i32, %c0_i32_0 : i32, i32
  }
  func.func @transform_2(%arg0: i32) -> (i32, i32) {
    %c0_i32 = arith.constant 0 : i32
    %c0_i32_0 = arith.constant 0 : i32
    %c0_i32_1 = arith.constant 0 : i32
    return %c0_i32, %c0_i32_0 : i32, i32
  }
  func.func @transform_3(%arg0: i32) -> (i32, i32) {
    %c0_i32 = arith.constant 0 : i32
    %c0_i32_0 = arith.constant 0 : i32
    %c0_i32_1 = arith.constant 0 : i32
    return %c0_i32, %c0_i32_0 : i32, i32
  }
  func.func @transform_4(%arg0: i32) -> (i32, i32) {
    %c0_i32 = arith.constant 0 : i32
    %c0_i32_0 = arith.constant 0 : i32
    return %arg0, %c0_i32 : i32, i32
  }
}

</mosaic_0001>

<llo_original>
// kernel: tpu_custom_call.1
$region0: #{tpu_custom_call.1}
  #allocation0 [shape = 'u32[]', space=smem, size = 0x4, offset = 0x4, fixed_abs, tag = 'smem constant byte address 0x4 - core index']
  #allocation1 [shape = 'u32[144,128]{1,0:T(1,128)}', space=vmem, size = 0x12000, scoped, tag = 'internal scratch']
  %s0 = inlined_call_operand.hbm [shape: f32[8,16], index: 0, kind: input, shape index: {}]
  %s1 = inlined_call_operand.hbm [shape: bf16[16,128], index: 1, kind: input, shape index: {}]
  %s2 = inlined_call_operand.hbm [shape: bf16[128,384], index: 2, kind: input, shape index: {}]
  %s3 = inlined_call_operand.vmem [shape: f32[1,512], index: 3, kind: input, shape index: {}]
  %s4 = inlined_call_operand.hbm [shape: f32[8,128], index: 4, kind: output, shape index: {}]
  %s5 = sld [smem:[#allocation0]]
  $region38: #{tpu_custom_call.1} parent=0
    _
  %s7 = ssub.s32 1, %s5
  %s8 = scalar_select 0, %s7, %s5
  $region1: #{tpu_custom_call.1} parent=0
    #allocation2 [shape = 'u8[4096]{0}', space=vmem, size = 0x1000, scoped, tag = 'input window, operand 0, single buffered']
    #allocation3 [shape = 's32[1]{0}', space=sflag, size = 0x4, scoped, tag = 'scoped memory for tpu_custom_call.1']
    #allocation4 [shape = 's32[1]{0}', space=sflag, size = 0x4, scoped, tag = 'scoped memory for tpu_custom_call.1']
    #allocation5 [shape = 'u8[4096]{0}', space=vmem, size = 0x1000, scoped, tag = 'input window, operand 1, single buffered']
    #allocation6 [shape = 's32[1]{0}', space=sflag, size = 0x4, scoped, tag = 'scoped memory for tpu_custom_call.1']
    #allocation7 [shape = 'u8[98304]{0}', space=vmem, size = 0x18000, scoped, tag = 'input window, operand 2, single buffered']
    #allocation8 [shape = 'u8[4096]{0}', space=vmem, size = 0x1000, scoped, tag = 'output window, operand 0, single buffered']
    %9 = vsyncpa [#allocation3], 0
    %10 = vsyncpa [#allocation6], 0
    %11 = vsyncpa [#allocation4], 0
    // Predicated region
    $region2: #{tpu_custom_call.1} parent=1 // pred_check
      _
    $region3: #{tpu_custom_call.1} parent=1 // pred_check_branch
      %13 = sbr.rel (0) target = $region5
    $region4: #{tpu_custom_call.1} parent=1 // pred_region
      %s15 = ssub.s32 128, 128
      %16 = vsyncadd [#allocation3], %s15
      %s18 = sshll.u32 [#allocation2], 4
      %s19 = int_to_ptr.vmem [resolvable:$true] %s18
      %21 = dma.hbm_to_vmem [thread:$0]  %s0, 128, %s19, [#allocation3]
    $region5: #{tpu_custom_call.1} parent=1 // pred_fallthru
      _
    // Predicated region
    $region6: #{tpu_custom_call.1} parent=1 // pred_check
      _
    $region7: #{tpu_custom_call.1} parent=1 // pred_check_branch
      %23 = sbr.rel (0) target = $region9
    $region8: #{tpu_custom_call.1} parent=1 // pred_region
      %s25 = ssub.s32 128, 128
      %26 = vsyncadd [#allocation6], %s25
      %s27 = sshll.u32 [#allocation5], 4
      %s28 = int_to_ptr.vmem [resolvable:$true] %s27
      %33 = dma.hbm_to_vmem [thread:$0]  %s1, 128, %s28, [#allocation6], 64, 64, 4
    $region9: #{tpu_custom_call.1} parent=1 // pred_fallthru
      _
    // Predicated region
    $region10: #{tpu_custom_call.1} parent=1 // pred_check
      _
    $region11: #{tpu_custom_call.1} parent=1 // pred_check_branch
      %35 = sbr.rel (0) target = $region13
    $region12: #{tpu_custom_call.1} parent=1 // pred_region
      %s37 = ssub.s32 3072, 3072
      %38 = vsyncadd [#allocation6], %s37
      %s39 = sshll.u32 [#allocation7], 4
      %s40 = int_to_ptr.vmem [resolvable:$true] %s39
      %45 = dma.hbm_to_vmem [thread:$0]  %s2, 3072, %s40, [#allocation6], 192, 192, 12
    $region13: #{tpu_custom_call.1} parent=1 // pred_fallthru
      _
    // Predicated region
    $region14: #{tpu_custom_call.1} parent=1 // pred_check
      _
    $region15: #{tpu_custom_call.1} parent=1 // pred_check_branch
      %47 = sbr.rel (0) target = $region17
    $region16: #{tpu_custom_call.1} parent=1 // pred_region
      _
    $region17: #{tpu_custom_call.1} parent=1 // pred_fallthru
      _
    // Predicated region
    $region18: #{tpu_custom_call.1} parent=1 // pred_check
      _
    $region19: #{tpu_custom_call.1} parent=1 // pred_check_branch
      %49 = sbr.rel (0) target = $region21
    $region20: #{tpu_custom_call.1} parent=1 // pred_region
      %50 = dma.done [#allocation3], 128
    $region21: #{tpu_custom_call.1} parent=1 // pred_fallthru
      _
    // Predicated region
    $region22: #{tpu_custom_call.1} parent=1 // pred_check
      _
    $region23: #{tpu_custom_call.1} parent=1 // pred_check_branch
      %52 = sbr.rel (0) target = $region25
    $region24: #{tpu_custom_call.1} parent=1 // pred_region
      %53 = dma.done [#allocation6], 128
    $region25: #{tpu_custom_call.1} parent=1 // pred_fallthru
      _
    // Predicated region
    $region26: #{tpu_custom_call.1} parent=1 // pred_check
      _
    $region27: #{tpu_custom_call.1} parent=1 // pred_check_branch
      %55 = sbr.rel (0) target = $region29
    $region28: #{tpu_custom_call.1} parent=1 // pred_region
      %56 = dma.done [#allocation6], 3072
    $region29: #{tpu_custom_call.1} parent=1 // pred_fallthru
      _
    %v58 = vld [vmem:[#allocation2] sm:$0xff]
    %v59 = vpack.c.bf16 %v58, %v58
    %v60 = vld [vmem:[#allocation5] sm:$0xf]
    %v61 = vld [vmem:[#allocation5 + $0x4] sm:$0xf]
    %v62 = vld [vmem:[%s3] sm:$0x1]
    %v64 = vlaneseq
    %v65 = vshrl.u32 %v64, 7
    %v66 = vsub.s32 0, %v65
    %v67 = vrot.slane %v62, %v66
    %v71 = vunpack.c.l.b16 %v60
    %v72 = vunpack.c.l.b16 %v61
    %v73 = vpack.c.b16 %v72, %v71
    %vm75 = vcmask 130048
    %v77 = vsel %vm75, %v59, 0
    %79 = vmatprep.subr.bf16.mxu0 0
    %80 = vmatpush1.bf16.msra.mxu0 0
    %81 = vmatprep.subr.bf16.mxu0 0
    %82 = vmatpush1.bf16.msra.mxu0 0
    %83 = vmatprep.subr.bf16.mxu0 0
    %84 = vmatpush1.bf16.msra.mxu0 0
    %85 = vmatprep.subr.bf16.mxu0 0
    %86 = vmatpush1.bf16.msra.mxu0 0
    %87 = vmatprep.subr.bf16.mxu0 0
    %88 = vmatpush1.bf16.msra.mxu0 0
    %89 = vmatprep.subr.bf16.mxu0 0
    %90 = vmatpush1.bf16.msra.mxu0 0
    %91 = vmatprep.subr.bf16.mxu0 0
    %92 = vmatpush1.bf16.msra.mxu0 0
    %93 = vmatprep.subr.bf16.mxu0 0
    %94 = vmatpush1.bf16.msra.mxu0 %v73
    %95 = vmatprep.subr.bf16.mxu0 0
    %96 = vmatpush2.bf16.msra.mxu0 0
    %97 = vmatprep.subr.bf16.mxu0 0
    %98 = vmatpush2.bf16.msra.mxu0 0
    %99 = vmatprep.subr.bf16.mxu0 0
    %100 = vmatpush2.bf16.msra.mxu0 0
    %101 = vmatprep.subr.bf16.mxu0 0
    %102 = vmatpush2.bf16.msra.mxu0 0
    %103 = vmatprep.subr.bf16.mxu0 0
    %104 = vmatpush2.bf16.msra.mxu0 0
    %105 = vmatprep.subr.bf16.mxu0 0
    %106 = vmatpush2.bf16.msra.mxu0 0
    %107 = vmatprep.subr.bf16.mxu0 0
    %108 = vmatpush2.bf16.msra.mxu0 0
    %109 = vmatprep.subr.bf16.mxu0 0
    %110 = vmatpush2.bf16.msra.mxu0 0
    %111 = vmatprep.mubr.bf16.mxu0 0
    %112 = vmatmul.mubr.bf16.gmra.mxu0 %v77
    %v113 = vpop.f32.mrf.mxu0
    %v114 = vadd.f32 %v67, %v113
    %v115 = vpop.f32.mrf.mxu0
    %v116 = vpop.f32.mrf.mxu0
    %v117 = vpop.f32.mrf.mxu0
    %118 = vdwg.mxu0
    %v119 = vmax.f32 %v114, 0.0
    %v120 = vld [vmem:[#allocation7] sm:$0xf]
    %v121 = vld [vmem:[#allocation7 + $0xc] sm:$0xf]
    %v122 = vld [vmem:[#allocation7 + $0x18] sm:$0xf]
    %v123 = vld [vmem:[#allocation7 + $0x24] sm:$0xf]
    %v124 = vld [vmem:[#allocation7 + $0x30] sm:$0xf]
    %v125 = vld [vmem:[#allocation7 + $0x3c] sm:$0xf]
    %v126 = vld [vmem:[#allocation7 + $0x48] sm:$0xf]
    %v127 = vld [vmem:[#allocation7 + $0x54] sm:$0xf]
    %v128 = vld [vmem:[#allocation7 + $0x60] sm:$0xf]
    %v129 = vld [vmem:[#allocation7 + $0x6c] sm:$0xf]
    %v130 = vld [vmem:[#allocation7 + $0x78] sm:$0xf]
    %v131 = vld [vmem:[#allocation7 + $0x84] sm:$0xf]
    %v132 = vld [vmem:[#allocation7 + $0x90] sm:$0xf]
    %v133 = vld [vmem:[#allocation7 + $0x9c] sm:$0xf]
    %v134 = vld [vmem:[#allocation7 + $0xa8] sm:$0xf]
    %v135 = vld [vmem:[#allocation7 + $0xb4] sm:$0xf]
    %v136 = vld [vmem:[%s3 + $0x1] sm:$0x1]
    %v137 = vpack.c.bf16 %v119, %v119
    %v139 = vlaneseq
    %v140 = vshrl.u32 %v139, 7
    %v141 = vsub.s32 0, %v140
    %v142 = vrot.slane %v136, %v141
    %v160 = vunpack.c.l.b16 %v120
    %v161 = vunpack.c.l.b16 %v121
    %v162 = vunpack.c.l.b16 %v122
    %v163 = vunpack.c.l.b16 %v123
    %v164 = vunpack.c.l.b16 %v124
    %v165 = vunpack.c.l.b16 %v125
    %v166 = vunpack.c.l.b16 %v126
    %v167 = vunpack.c.l.b16 %v127
    %v168 = vunpack.c.l.b16 %v128
    %v169 = vunpack.c.l.b16 %v129
    %v170 = vunpack.c.l.b16 %v130
    %v171 = vunpack.c.l.b16 %v131
    %v172 = vunpack.c.l.b16 %v132
    %v173 = vunpack.c.l.b16 %v133
    %v174 = vunpack.c.l.b16 %v134
    %v175 = vunpack.c.l.b16 %v135
    %v176 = vpack.c.b16 %v161, %v160
    %v177 = vpack.c.b16 %v163, %v162
    %v178 = vpack.c.b16 %v165, %v164
    %v179 = vpack.c.b16 %v167, %v166
    %v180 = vpack.c.b16 %v169, %v168
    %v181 = vpack.c.b16 %v171, %v170
    %v182 = vpack.c.b16 %v173, %v172
    %v183 = vpack.c.b16 %v175, %v174
    %192 = vmatprep.subr.bf16.mxu0 0
    %193 = vmatpush1.bf16.msra.mxu0 %v183
    %194 = vmatprep.subr.bf16.mxu0 0
    %195 = vmatpush1.bf16.msra.mxu0 %v182
    %196 = vmatprep.subr.bf16.mxu0 0
    %197 = vmatpush1.bf16.msra.mxu0 %v181
    %198 = vmatprep.subr.bf16.mxu0 0
    %199 = vmatpush1.bf16.msra.mxu0 %v180
    %200 = vmatprep.subr.bf16.mxu0 0
    %201 = vmatpush1.bf16.msra.mxu0 %v179
    %202 = vmatprep.subr.bf16.mxu0 0
    %203 = vmatpush1.bf16.msra.mxu0 %v178
    %204 = vmatprep.subr.bf16.mxu0 0
    %205 = vmatpush1.bf16.msra.mxu0 %v177
    %206 = vmatprep.subr.bf16.mxu0 0
    %207 = vmatpush1.bf16.msra.mxu0 %v176
    %208 = vmatprep.subr.bf16.mxu0 0
    %209 = vmatpush2.bf16.msra.mxu0 0
    %210 = vmatprep.subr.bf16.mxu0 0
    %211 = vmatpush2.bf16.msra.mxu0 0
    %212 = vmatprep.subr.bf16.mxu0 0
    %213 = vmatpush2.bf16.msra.mxu0 0
    %214 = vmatprep.subr.bf16.mxu0 0
    %215 = vmatpush2.bf16.msra.mxu0 0
    %216 = vmatprep.subr.bf16.mxu0 0
    %217 = vmatpush2.bf16.msra.mxu0 0
    %218 = vmatprep.subr.bf16.mxu0 0
    %219 = vmatpush2.bf16.msra.mxu0 0
    %220 = vmatprep.subr.bf16.mxu0 0
    %221 = vmatpush2.bf16.msra.mxu0 0
    %222 = vmatprep.subr.bf16.mxu0 0
    %223 = vmatpush2.bf16.msra.mxu0 0
    %224 = vmatprep.mubr.bf16.mxu0 0
    %225 = vmatmul.mubr.bf16.gmra.mxu0 %v137
    %v226 = vpop.f32.mrf.mxu0
    %v227 = vadd.f32 %v142, %v226
    %v228 = vpop.f32.mrf.mxu0
    %v229 = vpop.f32.mrf.mxu0
    %v230 = vpop.f32.mrf.mxu0
    %231 = vdwg.mxu0
    %v232 = vmax.f32 %v227, 0.0
    %v233 = vld [vmem:[#allocation7 + $0x4] sm:$0xf]
    %v234 = vld [vmem:[#allocation7 + $0x10] sm:$0xf]
    %v235 = vld [vmem:[#allocation7 + $0x1c] sm:$0xf]
    %v236 = vld [vmem:[#allocation7 + $0x28] sm:$0xf]
    %v237 = vld [vmem:[#allocation7 + $0x34] sm:$0xf]
    %v238 = vld [vmem:[#allocation7 + $0x40] sm:$0xf]
    %v239 = vld [vmem:[#allocation7 + $0x4c] sm:$0xf]
    %v240 = vld [vmem:[#allocation7 + $0x58] sm:$0xf]
    %v241 = vld [vmem:[#allocation7 + $0x64] sm:$0xf]
    %v242 = vld [vmem:[#allocation7 + $0x70] sm:$0xf]
    %v243 = vld [vmem:[#allocation7 + $0x7c] sm:$0xf]
    %v244 = vld [vmem:[#allocation7 + $0x88] sm:$0xf]
    %v245 = vld [vmem:[#allocation7 + $0x94] sm:$0xf]
    %v246 = vld [vmem:[#allocation7 + $0xa0] sm:$0xf]
    %v247 = vld [vmem:[#allocation7 + $0xac] sm:$0xf]
    %v248 = vld [vmem:[#allocation7 + $0xb8] sm:$0xf]
    %v249 = vld [vmem:[%s3 + $0x2] sm:$0x1]
    %v250 = vpack.c.bf16 %v232, %v232
    %v252 = vlaneseq
    %v253 = vshrl.u32 %v252, 7
    %v254 = vsub.s32 0, %v253
    %v255 = vrot.slane %v249, %v254
    %v273 = vunpack.c.l.b16 %v233
    %v274 = vunpack.c.l.b16 %v234
    %v275 = vunpack.c.l.b16 %v235
    %v276 = vunpack.c.l.b16 %v236
    %v277 = vunpack.c.l.b16 %v237
    %v278 = vunpack.c.l.b16 %v238
    %v279 = vunpack.c.l.b16 %v239
    %v280 = vunpack.c.l.b16 %v240
    %v281 = vunpack.c.l.b16 %v241
    %v282 = vunpack.c.l.b16 %v242
    %v283 = vunpack.c.l.b16 %v243
    %v284 = vunpack.c.l.b16 %v244
    %v285 = vunpack.c.l.b16 %v245
    %v286 = vunpack.c.l.b16 %v246
    %v287 = vunpack.c.l.b16 %v247
    %v288 = vunpack.c.l.b16 %v248
    %v289 = vpack.c.b16 %v274, %v273
    %v290 = vpack.c.b16 %v276, %v275
    %v291 = vpack.c.b16 %v278, %v277
    %v292 = vpack.c.b16 %v280, %v279
    %v293 = vpack.c.b16 %v282, %v281
    %v294 = vpack.c.b16 %v284, %v283
    %v295 = vpack.c.b16 %v286, %v285
    %v296 = vpack.c.b16 %v288, %v287
    %305 = vmatprep.subr.bf16.mxu0 0
    %306 = vmatpush1.bf16.msra.mxu0 %v296
    %307 = vmatprep.subr.bf16.mxu0 0
    %308 = vmatpush1.bf16.msra.mxu0 %v295
    %309 = vmatprep.subr.bf16.mxu0 0
    %310 = vmatpush1.bf16.msra.mxu0 %v294
    %311 = vmatprep.subr.bf16.mxu0 0
    %312 = vmatpush1.bf16.msra.mxu0 %v293
    %313 = vmatprep.subr.bf16.mxu0 0
    %314 = vmatpush1.bf16.msra.mxu0 %v292
    %315 = vmatprep.subr.bf16.mxu0 0
    %316 = vmatpush1.bf16.msra.mxu0 %v291
    %317 = vmatprep.subr.bf16.mxu0 0
    %318 = vmatpush1.bf16.msra.mxu0 %v290
    %319 = vmatprep.subr.bf16.mxu0 0
    %320 = vmatpush1.bf16.msra.mxu0 %v289
    %321 = vmatprep.subr.bf16.mxu0 0
    %322 = vmatpush2.bf16.msra.mxu0 0
    %323 = vmatprep.subr.bf16.mxu0 0
    %324 = vmatpush2.bf16.msra.mxu0 0
    %325 = vmatprep.subr.bf16.mxu0 0
    %326 = vmatpush2.bf16.msra.mxu0 0
    %327 = vmatprep.subr.bf16.mxu0 0
    %328 = vmatpush2.bf16.msra.mxu0 0
    %329 = vmatprep.subr.bf16.mxu0 0
    %330 = vmatpush2.bf16.msra.mxu0 0
    %331 = vmatprep.subr.bf16.mxu0 0
    %332 = vmatpush2.bf16.msra.mxu0 0
    %333 = vmatprep.subr.bf16.mxu0 0
    %334 = vmatpush2.bf16.msra.mxu0 0
    %335 = vmatprep.subr.bf16.mxu0 0
    %336 = vmatpush2.bf16.msra.mxu0 0
    %337 = vmatprep.mubr.bf16.mxu0 0
    %338 = vmatmul.mubr.bf16.gmra.mxu0 %v250
    %v339 = vpop.f32.mrf.mxu0
    %v340 = vadd.f32 %v255, %v339
    %v341 = vpop.f32.mrf.mxu0
    %v342 = vpop.f32.mrf.mxu0
    %v343 = vpop.f32.mrf.mxu0
    %344 = vdwg.mxu0
    %v345 = vmax.f32 %v340, 0.0
    %v346 = vld [vmem:[#allocation7 + $0x8] sm:$0xf]
    %v347 = vld [vmem:[#allocation7 + $0x14] sm:$0xf]
    %v348 = vld [vmem:[#allocation7 + $0x20] sm:$0xf]
    %v349 = vld [vmem:[#allocation7 + $0x2c] sm:$0xf]
    %v350 = vld [vmem:[#allocation7 + $0x38] sm:$0xf]
    %v351 = vld [vmem:[#allocation7 + $0x44] sm:$0xf]
    %v352 = vld [vmem:[#allocation7 + $0x50] sm:$0xf]
    %v353 = vld [vmem:[#allocation7 + $0x5c] sm:$0xf]
    %v354 = vld [vmem:[#allocation7 + $0x68] sm:$0xf]
    %v355 = vld [vmem:[#allocation7 + $0x74] sm:$0xf]
    %v356 = vld [vmem:[#allocation7 + $0x80] sm:$0xf]
    %v357 = vld [vmem:[#allocation7 + $0x8c] sm:$0xf]
    %v358 = vld [vmem:[#allocation7 + $0x98] sm:$0xf]
    %v359 = vld [vmem:[#allocation7 + $0xa4] sm:$0xf]
    %v360 = vld [vmem:[#allocation7 + $0xb0] sm:$0xf]
    %v361 = vld [vmem:[#allocation7 + $0xbc] sm:$0xf]
    %v362 = vld [vmem:[%s3 + $0x3] sm:$0x1]
    %v363 = vpack.c.bf16 %v345, %v345
    %v365 = vlaneseq
    %v366 = vshrl.u32 %v365, 7
    %v367 = vsub.s32 0, %v366
    %v368 = vrot.slane %v362, %v367
    %v386 = vunpack.c.l.b16 %v346
    %v387 = vunpack.c.l.b16 %v347
    %v388 = vunpack.c.l.b16 %v348
    %v389 = vunpack.c.l.b16 %v349
    %v390 = vunpack.c.l.b16 %v350
    %v391 = vunpack.c.l.b16 %v351
    %v392 = vunpack.c.l.b16 %v352
    %v393 = vunpack.c.l.b16 %v353
    %v394 = vunpack.c.l.b16 %v354
    %v395 = vunpack.c.l.b16 %v355
    %v396 = vunpack.c.l.b16 %v356
    %v397 = vunpack.c.l.b16 %v357
    %v398 = vunpack.c.l.b16 %v358
    %v399 = vunpack.c.l.b16 %v359
    %v400 = vunpack.c.l.b16 %v360
    %v401 = vunpack.c.l.b16 %v361
    %v402 = vpack.c.b16 %v387, %v386
    %v403 = vpack.c.b16 %v389, %v388
    %v404 = vpack.c.b16 %v391, %v390
    %v405 = vpack.c.b16 %v393, %v392
    %v406 = vpack.c.b16 %v395, %v394
    %v407 = vpack.c.b16 %v397, %v396
    %v408 = vpack.c.b16 %v399, %v398
    %v409 = vpack.c.b16 %v401, %v400
    %418 = vmatprep.subr.bf16.mxu0 0
    %419 = vmatpush1.bf16.msra.mxu0 %v409
    %420 = vmatprep.subr.bf16.mxu0 0
    %421 = vmatpush1.bf16.msra.mxu0 %v408
    %422 = vmatprep.subr.bf16.mxu0 0
    %423 = vmatpush1.bf16.msra.mxu0 %v407
    %424 = vmatprep.subr.bf16.mxu0 0
    %425 = vmatpush1.bf16.msra.mxu0 %v406
    %426 = vmatprep.subr.bf16.mxu0 0
    %427 = vmatpush1.bf16.msra.mxu0 %v405
    %428 = vmatprep.subr.bf16.mxu0 0
    %429 = vmatpush1.bf16.msra.mxu0 %v404
    %430 = vmatprep.subr.bf16.mxu0 0
    %431 = vmatpush1.bf16.msra.mxu0 %v403
    %432 = vmatprep.subr.bf16.mxu0 0
    %433 = vmatpush1.bf16.msra.mxu0 %v402
    %434 = vmatprep.subr.bf16.mxu0 0
    %435 = vmatpush2.bf16.msra.mxu0 0
    %436 = vmatprep.subr.bf16.mxu0 0
    %437 = vmatpush2.bf16.msra.mxu0 0
    %438 = vmatprep.subr.bf16.mxu0 0
    %439 = vmatpush2.bf16.msra.mxu0 0
    %440 = vmatprep.subr.bf16.mxu0 0
    %441 = vmatpush2.bf16.msra.mxu0 0
    %442 = vmatprep.subr.bf16.mxu0 0
    %443 = vmatpush2.bf16.msra.mxu0 0
    %444 = vmatprep.subr.bf16.mxu0 0
    %445 = vmatpush2.bf16.msra.mxu0 0
    %446 = vmatprep.subr.bf16.mxu0 0
    %447 = vmatpush2.bf16.msra.mxu0 0
    %448 = vmatprep.subr.bf16.mxu0 0
    %449 = vmatpush2.bf16.msra.mxu0 0
    %450 = vmatprep.mubr.bf16.mxu0 0
    %451 = vmatmul.mubr.bf16.gmra.mxu0 %v363
    %v452 = vpop.f32.mrf.mxu0
    %v453 = vadd.f32 %v368, %v452
    %v454 = vpop.f32.mrf.mxu0
    %v455 = vpop.f32.mrf.mxu0
    %v456 = vpop.f32.mrf.mxu0
    %457 = vdwg.mxu0
    %458 = vst [vmem:[#allocation8] sm:$0xff] %v453
    // Predicated region
    $region30: #{tpu_custom_call.1} parent=1 // pred_check
      _
    $region31: #{tpu_custom_call.1} parent=1 // pred_check_branch
      %460 = sbr.rel (0) target = $region33
    $region32: #{tpu_custom_call.1} parent=1 // pred_region
      %s462 = ssub.s32 128, 128
      %463 = vsyncadd [#allocation4], %s462
      %s465 = sshll.u32 [#allocation8], 4
      %s466 = int_to_ptr.vmem [resolvable:$true] %s465
      %468 = dma.vmem_to_hbm [thread:$0]  %s466, 128, %s4, [#allocation4]
    $region33: #{tpu_custom_call.1} parent=1 // pred_fallthru
      _
    // Predicated region
    $region34: #{tpu_custom_call.1} parent=1 // pred_check
      _
    $region35: #{tpu_custom_call.1} parent=1 // pred_check_branch
      %470 = sbr.rel (0) target = $region37
    $region36: #{tpu_custom_call.1} parent=1 // pred_region
      %471 = dma.done [#allocation4], 128
    $region37: #{tpu_custom_call.1} parent=1 // pred_fallthru
      _
    %472 = vsyncpa [#allocation3], 1
    %473 = vsyncpa [#allocation6], 1
    %474 = vsyncpa [#allocation4], 1

</llo_original>
